<compile_context>
chip_gen: v7x
topology: tpu7x:2x2x1
jax: 0.10.0
libtpu: 0.0.40
codegen_flags: <defaults>
</compile_context>

<pallas_src>
import jax
import jax.numpy as jnp
import numpy as np
from jax.experimental import pallas as pl
from jax.experimental.pallas import tpu as pltpu

# ---- static hyper-parameters (small, consistent with the module) -----------
B = 2            # batch_size
L = 16           # max_sent_len
D = 8            # word_dim (embed_dim)
VOCAB = 20       # vocab_size
C = 4            # class_size
F_NUM = 100      # conv1/2/3 hard-code 100 output filters in the module
PAD_IDX = VOCAB + 1                  # nn.Embedding padding_idx (zero row)

W3, W4, W5 = L - 2, L - 3, L - 4     # valid conv output lengths (14, 13, 12)
K3, K4, K5 = 3 * D, 4 * D, 5 * D     # im2col window widths (24, 32, 40)

# ---- TPU-friendly padded sizes ----------------------------------------------
B_PAD = 8        # batch padded to 8 sublanes (dense FC rows / output store)
W_PAD = 16       # window count padded to a multiple of 8 (aligned pooling)
K_PAD = 128      # im2col contraction dim padded to a full 128-lane tile
F_PAD = 128      # 100 filters -> 128 lanes (dense conv output columns)
C_PAD = 128      # 4 classes -> 128 lanes (dense final store)

# static window-position table: window w covers token positions w .. w+4
_WIN_POS = np.arange(W_PAD)[:, None] + np.arange(5)[None, :]      # (16, 5)


# =============================================================================
# Pallas kernel
# =============================================================================
def _cnn_kernel(x_ref, w_all_ref, bias_ref, wfc_ref, bfc_ref, out_ref):
    # Fused conv-as-matmul for all 3 kernel sizes (bf16 operands, f32 acc):
    #   (B_PAD*W_PAD, K_PAD) @ (K_PAD, 3*F_PAD) on the MXU.
    s = jnp.dot(x_ref[...], w_all_ref[...],
                preferred_element_type=jnp.float32)
    # Single bias row broadcast over batch & window axes (f32). The reshape
    # splits the row dim on a multiple-of-8 boundary -> (8,128) tiling kept.
    s = s.reshape(B_PAD, W_PAD, 3 * F_PAD) + bias_ref[...][None, :, :]

    # In-kernel invalid-window mask (replaces the old 24 KiB bias_slab DMA):
    # window w is valid for conv-k group g iff w < {W3, W4, W5}[g].
    row = jax.lax.broadcasted_iota(jnp.int32, (W_PAD, 3 * F_PAD), 0)
    col = jax.lax.broadcasted_iota(jnp.int32, (W_PAD, 3 * F_PAD), 1)
    limit = jnp.where(col < F_PAD, W3, jnp.where(col < 2 * F_PAD, W4, W5))
    valid = row < limit
    # ReLU outputs are >= 0, so zeroing invalid windows never beats a valid
    # max.  Padded filter columns need no mask: their conv output and FC
    # weight rows are both exactly zero.
    act = jnp.where(valid[None, :, :], jnp.maximum(s, 0.0), 0.0)

    # Max-pool over the aligned window (sublane) axis -> (B_PAD, 3*F_PAD).
    pooled = jnp.max(act, axis=1)

    # Single fused FC over the concatenated [p3|p4|p5] feature slab; one
    # lane-dense whole-block store in f32.
    out_ref[...] = (jnp.dot(pooled.astype(jnp.bfloat16), wfc_ref[...],
                            preferred_element_type=jnp.float32)
                    + bfc_ref[...])


# =============================================================================
# One-time parameter preparation (hoisted out of the per-call path)
# =============================================================================
def prepare_inference_params(params):
    """Build padded/stacked kernel operands ONCE (host-side numpy)."""
    # stack the three conv weights into one (K_PAD, 3*F_PAD) slab
    w_all = np.zeros((K_PAD, 3 * F_PAD), np.float32)
    w_all[:K3, 0:F_NUM] = np.asarray(params["w3"])
    w_all[:K4, F_PAD:F_PAD + F_NUM] = np.asarray(params["w4"])
    w_all[:K5, 2 * F_PAD:2 * F_PAD + F_NUM] = np.asarray(params["w5"])

    # single bias row (padded filter columns stay 0 — they are harmless)
    bias_row = np.zeros((1, 3 * F_PAD), np.float32)
    bias_row[0, 0:F_NUM] = np.asarray(params["b3"])[0]
    bias_row[0, F_PAD:F_PAD + F_NUM] = np.asarray(params["b4"])[0]
    bias_row[0, 2 * F_PAD:2 * F_PAD + F_NUM] = np.asarray(params["b5"])[0]

    # FC weights padded to (3*F_PAD, C_PAD); padded rows/cols are zero.
    wfc = np.asarray(params["wfc"])
    wfc_pad = np.zeros((3 * F_PAD, C_PAD), np.float32)
    wfc_pad[0:F_NUM, :C] = wfc[0:F_NUM]
    wfc_pad[F_PAD:F_PAD + F_NUM, :C] = wfc[F_NUM:2 * F_NUM]
    wfc_pad[2 * F_PAD:2 * F_PAD + F_NUM, :C] = wfc[2 * F_NUM:]

    bfc_pad = np.zeros((1, C_PAD), np.float32)
    bfc_pad[0, :C] = np.asarray(params["bfc"])[0]

    return {
        # bf16 MXU-side operands (half the DMA bytes), f32 bias operands
        "emb": jnp.asarray(np.asarray(params["emb"]), jnp.bfloat16),
        "w_all": jnp.asarray(w_all, jnp.bfloat16),
        "bias_row": jnp.asarray(bias_row, jnp.float32),
        "wfc": jnp.asarray(wfc_pad, jnp.bfloat16),
        "bfc": jnp.asarray(bfc_pad, jnp.float32),
    }


# =============================================================================
# Forward
# =============================================================================
@jax.jit
def cnn_forward(inp, prep):
    # ---- minimal per-call glue (pure indexing, stays in XLA) ---------------
    # Pad batch & sentence tail with the padding index (its embedding row is
    # exactly zero), so no zeros/scatter ops are needed.
    inp_pad = jnp.pad(inp, ((0, B_PAD - B), (0, 4)),
                      constant_values=PAD_IDX)                   # (B_PAD, L+4)
    tok_win = inp_pad[:, _WIN_POS]                               # (B_PAD, W_PAD, 5)
    win = prep["emb"][tok_win]                                   # (B_PAD, W_PAD, 5, D) bf16
    win = win.reshape(B_PAD * W_PAD, K5)
    x = jnp.pad(win, ((0, 0), (0, K_PAD - K5)))                  # (128, 128) bf16

    flops = (2 * (B_PAD * W_PAD) * K_PAD * (3 * F_PAD)
             + 2 * B_PAD * (3 * F_PAD) * C_PAD)
    bytes_acc = (2 * (x.size + prep["w_all"].size + prep["wfc"].size)
                 + 4 * (prep["bias_row"].size + prep["bfc"].size
                        + B_PAD * C_PAD))

    vmem = pl.BlockSpec(memory_space=pltpu.MemorySpace.VMEM)
    out = pl.pallas_call(
        _cnn_kernel,
        out_shape=jax.ShapeDtypeStruct((B_PAD, C_PAD), jnp.float32),
        in_specs=[vmem] * 5,
        out_specs=vmem,
        cost_estimate=pl.CostEstimate(flops=flops, transcendentals=0,
                                      bytes_accessed=bytes_acc),
    )(x, prep["w_all"], prep["bias_row"], prep["wfc"], prep["bfc"])
    return out[:B, :C]


# =============================================================================
# Pure-JAX reference (f32) mirroring the PyTorch forward (eval mode)
# =============================================================================
def reference_forward(inp, params):
    emb = params["emb"][inp]
    flat = emb.reshape(B, L * D)

    def conv_pool(k, w_t, bias):
        w = L - k + 1
        idx = jnp.arange(w)[:, None] * D + jnp.arange(k * D)[None, :]
        win = flat[:, idx]                               # (B, w, k*D)
        s = jnp.einsum("bwk,kf->bwf", win, w_t) + bias   # (B, w, 100)
        return jnp.max(jax.nn.relu(s), axis=1)           # (B, 100)

    p3 = conv_pool(3, params["w3"], params["b3"])
    p4 = conv_pool(4, params["w4"], params["b4"])
    p5 = conv_pool(5, params["w5"], params["b5"])
    feat = jnp.concatenate([p3, p4, p5], axis=1)         # (B, 300)
    return feat @ params["wfc"] + params["bfc"]          # (B, C)


def init_params(key):
    ks = jax.random.split(key, 6)
    emb = jax.random.normal(ks[0], (VOCAB + 2, D), jnp.float32) * 0.1
    emb = emb.at[PAD_IDX].set(0.0)                       # padding_idx row = 0
    params = {
        "emb": emb,
        # conv weights stored transposed: (k*D, 100); biases as (1, 100)
        "w3": jax.random.normal(ks[1], (3 * D, F_NUM), jnp.float32) * 0.1,
        "b3": jnp.full((1, F_NUM), 0.01, jnp.float32),
        "w4": jax.random.normal(ks[2], (4 * D, F_NUM), jnp.float32) * 0.1,
        "b4": jnp.full((1, F_NUM), 0.02, jnp.float32),
        "w5": jax.random.normal(ks[3], (5 * D, F_NUM), jnp.float32) * 0.1,
        "b5": jnp.full((1, F_NUM), 0.03, jnp.float32),
        # fc: (300, C) transposed weight, (1, C) bias
        "wfc": jax.random.normal(ks[4], (3 * F_NUM, C), jnp.float32) * 0.1,
        "bfc": jnp.full((1, C), 0.05, jnp.float32),
    }
    return params


if __name__ == "__main__":
    key = jax.random.PRNGKey(0)
    params = init_params(key)
    prep = prepare_inference_params(params)          # hoisted, built once
    inp = jax.random.randint(jax.random.PRNGKey(1), (B, L), 0, VOCAB,
                             dtype=jnp.int32)

    out = cnn_forward(inp, prep)
    out = jax.block_until_ready(out)

    ref = reference_forward(inp, params)
    assert out.shape == (B, C)
    # bf16 operands / f32 accumulation -> tolerance relaxed vs. the f32 run.
    assert np.allclose(np.asarray(out), np.asarray(ref), atol=5e-2, rtol=5e-2)
    print("KERNEL_OK")
</pallas_src>

<mosaic_0001>
module attributes {stable_mosaic.version = 11 : i64} {
  func.func @_cnn_kernel(%arg0: memref<128x128xbf16, #tpu.memory_space<vmem>>, %arg1: memref<128x384xbf16, #tpu.memory_space<vmem>>, %arg2: memref<1x384xf32, #tpu.memory_space<vmem>>, %arg3: memref<384x128xbf16, #tpu.memory_space<vmem>>, %arg4: memref<1x128xf32, #tpu.memory_space<vmem>>, %arg5: memref<8x128xf32, #tpu.memory_space<vmem>>) attributes {dimension_semantics = [], scalar_prefetch = 0 : i64, scratch_operands = 0 : i64, tpu.core_type = #tpu.core_type<tc>} {
    %c0 = arith.constant 0 : index
    %c0_0 = arith.constant 0 : index
    %0 = vector.load %arg0[%c0, %c0_0] : memref<128x128xbf16, #tpu.memory_space<vmem>>, vector<128x128xbf16>
    %c0_1 = arith.constant 0 : index
    %c0_2 = arith.constant 0 : index
    %1 = vector.load %arg1[%c0_1, %c0_2] : memref<128x384xbf16, #tpu.memory_space<vmem>>, vector<128x384xbf16>
    %cst = arith.constant dense<0.000000e+00> : vector<128x384xf32>
    %2 = tpu.matmul %0, %1, %cst {dimension_numbers = #tpu.dot_dimension_numbers<[1], [0], [0], [1], [0, 0, 1, 1], [], []>} : vector<128x128xbf16>, vector<128x384xbf16>, vector<128x384xf32> -> vector<128x384xf32>
    %3 = vector.shape_cast %2 : vector<128x384xf32> to vector<8x16x384xf32>
    %c0_3 = arith.constant 0 : index
    %c0_4 = arith.constant 0 : index
    %4 = vector.load %arg2[%c0_3, %c0_4] : memref<1x384xf32, #tpu.memory_space<vmem>>, vector<1x384xf32>
    %5 = vector.shape_cast %4 : vector<1x384xf32> to vector<1x1x384xf32>
    %6 = vector.broadcast %5 : vector<1x1x384xf32> to vector<8x16x384xf32>
    %7 = arith.addf %3, %6 : vector<8x16x384xf32>
    %8 = tpu.iota {dimensions = array<i32: 0>} : vector<16x384xi32>
    %9 = tpu.iota {dimensions = array<i32: 1>} : vector<16x384xi32>
    %c128_i32 = arith.constant 128 : i32
    %10 = vector.broadcast %c128_i32 : i32 to vector<16x384xi32>
    %11 = arith.cmpi slt, %9, %10 : vector<16x384xi32>
    %c256_i32 = arith.constant 256 : i32
    %12 = vector.broadcast %c256_i32 : i32 to vector<16x384xi32>
    %13 = arith.cmpi slt, %9, %12 : vector<16x384xi32>
    %c13_i32 = arith.constant 13 : i32
    %c12_i32 = arith.constant 12 : i32
    %14 = vector.broadcast %c13_i32 : i32 to vector<16x384xi32>
    %15 = vector.broadcast %c12_i32 : i32 to vector<16x384xi32>
    %16 = arith.select %13, %14, %15 : vector<16x384xi1>, vector<16x384xi32>
    %c14_i32 = arith.constant 14 : i32
    %17 = vector.broadcast %c14_i32 : i32 to vector<16x384xi32>
    %18 = arith.select %11, %17, %16 : vector<16x384xi1>, vector<16x384xi32>
    %19 = arith.cmpi slt, %8, %18 : vector<16x384xi32>
    %20 = vector.shape_cast %19 : vector<16x384xi1> to vector<1x16x384xi1>
    %cst_5 = arith.constant 0.000000e+00 : f32
    %21 = vector.broadcast %cst_5 : f32 to vector<8x16x384xf32>
    %22 = arith.maximumf %7, %21 : vector<8x16x384xf32>
    %cst_6 = arith.constant 0.000000e+00 : f32
    %23 = vector.shape_cast %20 : vector<1x16x384xi1> to vector<1x16x384xi1>
    %24 = vector.broadcast %23 : vector<1x16x384xi1> to vector<8x16x384xi1>
    %25 = vector.broadcast %cst_6 : f32 to vector<8x16x384xf32>
    %26 = arith.select %24, %22, %25 : vector<8x16x384xi1>, vector<8x16x384xf32>
    %cst_7 = arith.constant dense<0xFF800000> : vector<8x384xf32>
    %27 = vector.multi_reduction <maximumf>, %26, %cst_7 [1] : vector<8x16x384xf32> to vector<8x384xf32>
    %28 = arith.truncf %27 : vector<8x384xf32> to vector<8x384xbf16>
    %c0_8 = arith.constant 0 : index
    %c0_9 = arith.constant 0 : index
    %29 = vector.load %arg3[%c0_8, %c0_9] : memref<384x128xbf16, #tpu.memory_space<vmem>>, vector<384x128xbf16>
    %cst_10 = arith.constant dense<0.000000e+00> : vector<8x128xf32>
    %30 = tpu.matmul %28, %29, %cst_10 {dimension_numbers = #tpu.dot_dimension_numbers<[1], [0], [0], [1], [0, 0, 1, 1], [], []>} : vector<8x384xbf16>, vector<384x128xbf16>, vector<8x128xf32> -> vector<8x128xf32>
    %c0_11 = arith.constant 0 : index
    %c0_12 = arith.constant 0 : index
    %31 = vector.load %arg4[%c0_11, %c0_12] : memref<1x128xf32, #tpu.memory_space<vmem>>, vector<1x128xf32>
    %32 = vector.broadcast %31 : vector<1x128xf32> to vector<8x128xf32>
    %33 = arith.addf %30, %32 : vector<8x128xf32>
    %c0_13 = arith.constant 0 : index
    %c0_14 = arith.constant 0 : index
    %34 = vector.load %arg5[%c0_13, %c0_14] : memref<8x128xf32, #tpu.memory_space<vmem>>, vector<8x128xf32>
    tpu.vector_store %arg5[%c0_13, %c0_14], %33 {strides = array<i32>} : memref<8x128xf32, #tpu.memory_space<vmem>>, vector<8x128xf32>,
    return
  }
}

</mosaic_0001>

<llo_original>
// kernel: cnn_forward.1
$region0: #{cnn_forward.1}
  #allocation0 [shape = 'u32[]', space=smem, size = 0x4, offset = 0x4, fixed_abs, tag = 'smem constant byte address 0x4 - core index']
  #allocation1 [shape = 'u32[144,128]{1,0:T(1,128)}', space=vmem, size = 0x12000, scoped, tag = 'internal scratch']
  %s0 = inlined_call_operand.vmem [shape: bf16[128,128], index: 0, kind: input, shape index: {}]
  %s1 = inlined_call_operand.vmem [shape: bf16[128,384], index: 1, kind: input, shape index: {}]
  %s2 = inlined_call_operand.vmem [shape: f32[1,384], index: 2, kind: input, shape index: {}]
  %s3 = inlined_call_operand.vmem [shape: bf16[384,128], index: 3, kind: input, shape index: {}]
  %s4 = inlined_call_operand.vmem [shape: f32[1,128], index: 4, kind: input, shape index: {}]
  %s5 = inlined_call_operand.vmem [shape: f32[8,128], index: 5, kind: output, shape index: {}]
  %s6 = sld [smem:[#allocation0]]
  $region30: #{cnn_forward.1} parent=0
    _
  %s8 = ssub.s32 1, %s6
  %s9 = scalar_select 0, %s8, %s6
  // Predicated region
  $region2: #{cnn_forward.1} parent=0 // pred_check
    _
  $region3: #{cnn_forward.1} parent=0 // pred_check_branch
    %11 = sbr.rel (0) target = $region5
  $region4: #{cnn_forward.1} parent=0 // pred_region
    _
  $region5: #{cnn_forward.1} parent=0 // pred_fallthru
    _
  // Predicated region
  $region6: #{cnn_forward.1} parent=0 // pred_check
    _
  $region7: #{cnn_forward.1} parent=0 // pred_check_branch
    %13 = sbr.rel (0) target = $region9
  $region8: #{cnn_forward.1} parent=0 // pred_region
    _
  $region9: #{cnn_forward.1} parent=0 // pred_fallthru
    _
  // Predicated region
  $region10: #{cnn_forward.1} parent=0 // pred_check
    _
  $region11: #{cnn_forward.1} parent=0 // pred_check_branch
    %15 = sbr.rel (0) target = $region13
  $region12: #{cnn_forward.1} parent=0 // pred_region
    _
  $region13: #{cnn_forward.1} parent=0 // pred_fallthru
    _
  // Predicated region
  $region14: #{cnn_forward.1} parent=0 // pred_check
    _
  $region15: #{cnn_forward.1} parent=0 // pred_check_branch
    %17 = sbr.rel (0) target = $region17
  $region16: #{cnn_forward.1} parent=0 // pred_region
    _
  $region17: #{cnn_forward.1} parent=0 // pred_fallthru
    _
  // Predicated region
  $region18: #{cnn_forward.1} parent=0 // pred_check
    _
  $region19: #{cnn_forward.1} parent=0 // pred_check_branch
    %19 = sbr.rel (0) target = $region21
  $region20: #{cnn_forward.1} parent=0 // pred_region
    _
  $region21: #{cnn_forward.1} parent=0 // pred_fallthru
    _
  %v21 = vld [vmem:[%s0] sm:$0xf]
  %v22 = vld [vmem:[%s0 + $0x4] sm:$0xf]
  %v23 = vld [vmem:[%s0 + $0x8] sm:$0xf]
  %v24 = vld [vmem:[%s0 + $0xc] sm:$0xf]
  %v25 = vld [vmem:[%s0 + $0x10] sm:$0xf]
  %v26 = vld [vmem:[%s0 + $0x14] sm:$0xf]
  %v27 = vld [vmem:[%s0 + $0x18] sm:$0xf]
  %v28 = vld [vmem:[%s0 + $0x1c] sm:$0xf]
  %v29 = vld [vmem:[%s0 + $0x20] sm:$0xf]
  %v30 = vld [vmem:[%s0 + $0x24] sm:$0xf]
  %v31 = vld [vmem:[%s0 + $0x28] sm:$0xf]
  %v32 = vld [vmem:[%s0 + $0x2c] sm:$0xf]
  %v33 = vld [vmem:[%s0 + $0x30] sm:$0xf]
  %v34 = vld [vmem:[%s0 + $0x34] sm:$0xf]
  %v35 = vld [vmem:[%s0 + $0x38] sm:$0xf]
  %v36 = vld [vmem:[%s0 + $0x3c] sm:$0xf]
  %v37 = vld [vmem:[%s1] sm:$0xff]
  %v38 = vld [vmem:[%s1 + $0x8] sm:$0xf]
  %v39 = vld [vmem:[%s1 + $0xc] sm:$0xff]
  %v40 = vld [vmem:[%s1 + $0x14] sm:$0xf]
  %v41 = vld [vmem:[%s1 + $0x18] sm:$0xff]
  %v42 = vld [vmem:[%s1 + $0x20] sm:$0xf]
  %v43 = vld [vmem:[%s1 + $0x24] sm:$0xff]
  %v44 = vld [vmem:[%s1 + $0x2c] sm:$0xf]
  %v45 = vld [vmem:[%s1 + $0x30] sm:$0xff]
  %v46 = vld [vmem:[%s1 + $0x38] sm:$0xf]
  %v47 = vld [vmem:[%s1 + $0x3c] sm:$0xff]
  %v48 = vld [vmem:[%s1 + $0x44] sm:$0xf]
  %v49 = vld [vmem:[%s1 + $0x48] sm:$0xff]
  %v50 = vld [vmem:[%s1 + $0x50] sm:$0xf]
  %v51 = vld [vmem:[%s1 + $0x54] sm:$0xff]
  %v52 = vld [vmem:[%s1 + $0x5c] sm:$0xf]
  %v53 = vld [vmem:[%s1 + $0x60] sm:$0xff]
  %v54 = vld [vmem:[%s1 + $0x68] sm:$0xf]
  %v55 = vld [vmem:[%s1 + $0x6c] sm:$0xff]
  %v56 = vld [vmem:[%s1 + $0x74] sm:$0xf]
  %v57 = vld [vmem:[%s1 + $0x78] sm:$0xff]
  %v58 = vld [vmem:[%s1 + $0x80] sm:$0xf]
  %v59 = vld [vmem:[%s1 + $0x84] sm:$0xff]
  %v60 = vld [vmem:[%s1 + $0x8c] sm:$0xf]
  %v61 = vld [vmem:[%s1 + $0x90] sm:$0xff]
  %v62 = vld [vmem:[%s1 + $0x98] sm:$0xf]
  %v63 = vld [vmem:[%s1 + $0x9c] sm:$0xff]
  %v64 = vld [vmem:[%s1 + $0xa4] sm:$0xf]
  %v65 = vld [vmem:[%s1 + $0xa8] sm:$0xff]
  %v66 = vld [vmem:[%s1 + $0xb0] sm:$0xf]
  %v67 = vld [vmem:[%s1 + $0xb4] sm:$0xff]
  %v68 = vld [vmem:[%s1 + $0xbc] sm:$0xf]
  %v85 = vunpack.c.l.b16 %v21
  %v86 = vunpack.c.l.b16 %v22
  %v87 = vunpack.c.l.b16 %v23
  %v88 = vunpack.c.l.b16 %v24
  %v89 = vunpack.c.l.b16 %v25
  %v90 = vunpack.c.l.b16 %v26
  %v91 = vunpack.c.l.b16 %v27
  %v92 = vunpack.c.l.b16 %v28
  %v93 = vunpack.c.l.b16 %v29
  %v94 = vunpack.c.l.b16 %v30
  %v95 = vunpack.c.l.b16 %v31
  %v96 = vunpack.c.l.b16 %v32
  %v97 = vunpack.c.l.b16 %v33
  %v98 = vunpack.c.l.b16 %v34
  %v99 = vunpack.c.l.b16 %v35
  %v100 = vunpack.c.l.b16 %v36
  %v101 = vpack.c.b16 %v86, %v85
  %v102 = vpack.c.b16 %v88, %v87
  %v103 = vpack.c.b16 %v90, %v89
  %v104 = vpack.c.b16 %v92, %v91
  %v105 = vpack.c.b16 %v94, %v93
  %v106 = vpack.c.b16 %v96, %v95
  %v107 = vpack.c.b16 %v98, %v97
  %v108 = vpack.c.b16 %v100, %v99
  %v149 = vunpack.c.l.b16 %v37
  %v150 = vunpack.c.h.b16 %v37
  %v151 = vunpack.c.l.b16 %v38
  %v152 = vunpack.c.l.b16 %v39
  %v153 = vunpack.c.h.b16 %v39
  %v154 = vunpack.c.l.b16 %v40
  %v155 = vunpack.c.l.b16 %v41
  %v156 = vunpack.c.h.b16 %v41
  %v157 = vunpack.c.l.b16 %v42
  %v158 = vunpack.c.l.b16 %v43
  %v159 = vunpack.c.h.b16 %v43
  %v160 = vunpack.c.l.b16 %v44
  %v161 = vunpack.c.l.b16 %v45
  %v162 = vunpack.c.h.b16 %v45
  %v163 = vunpack.c.l.b16 %v46
  %v164 = vunpack.c.l.b16 %v47
  %v165 = vunpack.c.h.b16 %v47
  %v166 = vunpack.c.l.b16 %v48
  %v167 = vunpack.c.l.b16 %v49
  %v168 = vunpack.c.h.b16 %v49
  %v169 = vunpack.c.l.b16 %v50
  %v170 = vunpack.c.l.b16 %v51
  %v171 = vunpack.c.h.b16 %v51
  %v172 = vunpack.c.l.b16 %v52
  %v173 = vunpack.c.l.b16 %v53
  %v174 = vunpack.c.h.b16 %v53
  %v175 = vunpack.c.l.b16 %v54
  %v176 = vunpack.c.l.b16 %v55
  %v177 = vunpack.c.h.b16 %v55
  %v178 = vunpack.c.l.b16 %v56
  %v179 = vunpack.c.l.b16 %v57
  %v180 = vunpack.c.h.b16 %v57
  %v181 = vunpack.c.l.b16 %v58
  %v182 = vunpack.c.l.b16 %v59
  %v183 = vunpack.c.h.b16 %v59
  %v184 = vunpack.c.l.b16 %v60
  %v185 = vunpack.c.l.b16 %v61
  %v186 = vunpack.c.h.b16 %v61
  %v187 = vunpack.c.l.b16 %v62
  %v188 = vunpack.c.l.b16 %v63
  %v189 = vunpack.c.h.b16 %v63
  %v190 = vunpack.c.l.b16 %v64
  %v191 = vunpack.c.l.b16 %v65
  %v192 = vunpack.c.h.b16 %v65
  %v193 = vunpack.c.l.b16 %v66
  %v194 = vunpack.c.l.b16 %v67
  %v195 = vunpack.c.h.b16 %v67
  %v196 = vunpack.c.l.b16 %v68
  %v197 = vpack.c.b16 %v152, %v149
  %v198 = vpack.c.b16 %v153, %v150
  %v199 = vpack.c.b16 %v154, %v151
  %v200 = vpack.c.b16 %v158, %v155
  %v201 = vpack.c.b16 %v159, %v156
  %v202 = vpack.c.b16 %v160, %v157
  %v203 = vpack.c.b16 %v164, %v161
  %v204 = vpack.c.b16 %v165, %v162
  %v205 = vpack.c.b16 %v166, %v163
  %v206 = vpack.c.b16 %v170, %v167
  %v207 = vpack.c.b16 %v171, %v168
  %v208 = vpack.c.b16 %v172, %v169
  %v209 = vpack.c.b16 %v176, %v173
  %v210 = vpack.c.b16 %v177, %v174
  %v211 = vpack.c.b16 %v178, %v175
  %v212 = vpack.c.b16 %v182, %v179
  %v213 = vpack.c.b16 %v183, %v180
  %v214 = vpack.c.b16 %v184, %v181
  %v215 = vpack.c.b16 %v188, %v185
  %v216 = vpack.c.b16 %v189, %v186
  %v217 = vpack.c.b16 %v190, %v187
  %v218 = vpack.c.b16 %v194, %v191
  %v219 = vpack.c.b16 %v195, %v192
  %v220 = vpack.c.b16 %v196, %v193
  %245 = vmatprep.subr.bf16.mxu0 %v198
  %246 = vmatpush1.bf16.msra.mxu0 %v197
  %247 = vmatprep.subr.bf16.mxu0 %v201
  %248 = vmatpush1.bf16.msra.mxu0 %v200
  %249 = vmatprep.subr.bf16.mxu0 %v204
  %250 = vmatpush1.bf16.msra.mxu0 %v203
  %251 = vmatprep.subr.bf16.mxu0 %v207
  %252 = vmatpush1.bf16.msra.mxu0 %v206
  %253 = vmatprep.subr.bf16.mxu0 %v210
  %254 = vmatpush1.bf16.msra.mxu0 %v209
  %255 = vmatprep.subr.bf16.mxu0 %v213
  %256 = vmatpush1.bf16.msra.mxu0 %v212
  %257 = vmatprep.subr.bf16.mxu0 %v216
  %258 = vmatpush1.bf16.msra.mxu0 %v215
  %259 = vmatprep.subr.bf16.mxu0 %v219
  %260 = vmatpush1.bf16.msra.mxu0 %v218
  %261 = vmatprep.subr.bf16.mxu0 0
  %262 = vmatpush1.bf16.msra.mxu0 0
  %263 = vmatprep.subr.bf16.mxu0 0
  %264 = vmatpush1.bf16.msra.mxu0 0
  %265 = vmatprep.subr.bf16.mxu0 0
  %266 = vmatpush1.bf16.msra.mxu0 0
  %267 = vmatprep.subr.bf16.mxu0 0
  %268 = vmatpush1.bf16.msra.mxu0 0
  %269 = vmatprep.subr.bf16.mxu0 0
  %270 = vmatpush1.bf16.msra.mxu0 0
  %271 = vmatprep.subr.bf16.mxu0 0
  %272 = vmatpush1.bf16.msra.mxu0 0
  %273 = vmatprep.subr.bf16.mxu0 0
  %274 = vmatpush1.bf16.msra.mxu0 0
  %275 = vmatprep.subr.bf16.mxu0 0
  %276 = vmatpush1.bf16.msra.mxu0 0
  %277 = vmatprep.mubr.bf16.mxu0 0
  %278 = vmatmul.mubr.bf16.gmra.mrb[0].mxu0 %v101
  %v279 = vpop.f32.mrb[0].mxu0
  %v280 = vadd.f32 0.0, %v279
  %v281 = vpop.f32.mrb[0].mxu0
  %v282 = vadd.f32 0.0, %v281
  %v283 = vpop.f32.mrb[0].mxu0
  %v284 = vadd.f32 0.0, %v283
  %v285 = vpop.f32.mrb[0].mxu0
  %v286 = vadd.f32 0.0, %v285
  %287 = vmatprep.mubr.bf16.mxu0 0
  %288 = vmatmul.mubr.bf16.gmra.mrb[0].mxu0 %v102
  %v289 = vpop.f32.mrb[0].mxu0
  %v290 = vadd.f32 0.0, %v289
  %v291 = vpop.f32.mrb[0].mxu0
  %v292 = vadd.f32 0.0, %v291
  %v293 = vpop.f32.mrb[0].mxu0
  %v294 = vadd.f32 0.0, %v293
  %v295 = vpop.f32.mrb[0].mxu0
  %v296 = vadd.f32 0.0, %v295
  %297 = vmatprep.mubr.bf16.mxu0 0
  %298 = vmatmul.mubr.bf16.gmra.mrb[0].mxu0 %v103
  %v299 = vpop.f32.mrb[0].mxu0
  %v300 = vadd.f32 0.0, %v299
  %v301 = vpop.f32.mrb[0].mxu0
  %v302 = vadd.f32 0.0, %v301
  %v303 = vpop.f32.mrb[0].mxu0
  %v304 = vadd.f32 0.0, %v303
  %v305 = vpop.f32.mrb[0].mxu0
  %v306 = vadd.f32 0.0, %v305
  %307 = vmatprep.mubr.bf16.mxu0 0
  %308 = vmatmul.mubr.bf16.gmra.mrb[0].mxu0 %v104
  %v309 = vpop.f32.mrb[0].mxu0
  %v310 = vadd.f32 0.0, %v309
  %v311 = vpop.f32.mrb[0].mxu0
  %v312 = vadd.f32 0.0, %v311
  %v313 = vpop.f32.mrb[0].mxu0
  %v314 = vadd.f32 0.0, %v313
  %v315 = vpop.f32.mrb[0].mxu0
  %v316 = vadd.f32 0.0, %v315
  %317 = vmatprep.mubr.bf16.mxu0 0
  %318 = vmatmul.mubr.bf16.gmra.mrb[0].mxu0 %v105
  %v319 = vpop.f32.mrb[0].mxu0
  %v320 = vadd.f32 0.0, %v319
  %v321 = vpop.f32.mrb[0].mxu0
  %v322 = vadd.f32 0.0, %v321
  %v323 = vpop.f32.mrb[0].mxu0
  %v324 = vadd.f32 0.0, %v323
  %v325 = vpop.f32.mrb[0].mxu0
  %v326 = vadd.f32 0.0, %v325
  %327 = vmatprep.mubr.bf16.mxu0 0
  %328 = vmatmul.mubr.bf16.gmra.mrb[0].mxu0 %v106
  %v329 = vpop.f32.mrb[0].mxu0
  %v330 = vadd.f32 0.0, %v329
  %v331 = vpop.f32.mrb[0].mxu0
  %v332 = vadd.f32 0.0, %v331
  %v333 = vpop.f32.mrb[0].mxu0
  %v334 = vadd.f32 0.0, %v333
  %v335 = vpop.f32.mrb[0].mxu0
  %v336 = vadd.f32 0.0, %v335
  %337 = vmatprep.mubr.bf16.mxu0 0
  %338 = vmatmul.mubr.bf16.gmra.mrb[0].mxu0 %v107
  %v339 = vpop.f32.mrb[0].mxu0
  %v340 = vadd.f32 0.0, %v339
  %v341 = vpop.f32.mrb[0].mxu0
  %v342 = vadd.f32 0.0, %v341
  %v343 = vpop.f32.mrb[0].mxu0
  %v344 = vadd.f32 0.0, %v343
  %v345 = vpop.f32.mrb[0].mxu0
  %v346 = vadd.f32 0.0, %v345
  %347 = vmatprep.mubr.bf16.mxu0 0
  %348 = vmatmul.mubr.bf16.gmra.mrb[0].mxu0 %v108
  %v349 = vpop.f32.mrb[0].mxu0
  %v350 = vadd.f32 0.0, %v349
  %v351 = vpop.f32.mrb[0].mxu0
  %v352 = vadd.f32 0.0, %v351
  %v353 = vpop.f32.mrb[0].mxu0
  %v354 = vadd.f32 0.0, %v353
  %v355 = vpop.f32.mrb[0].mxu0
  %v356 = vadd.f32 0.0, %v355
  %357 = vdwg.mxu0
  %358 = vmatprep.subr.bf16.mxu0 0
  %359 = vmatpush1.bf16.msra.mxu0 %v199
  %360 = vmatprep.subr.bf16.mxu0 0
  %361 = vmatpush1.bf16.msra.mxu0 %v202
  %362 = vmatprep.subr.bf16.mxu0 0
  %363 = vmatpush1.bf16.msra.mxu0 %v205
  %364 = vmatprep.subr.bf16.mxu0 0
  %365 = vmatpush1.bf16.msra.mxu0 %v208
  %366 = vmatprep.subr.bf16.mxu0 0
  %367 = vmatpush1.bf16.msra.mxu0 %v211
  %368 = vmatprep.subr.bf16.mxu0 0
  %369 = vmatpush1.bf16.msra.mxu0 %v214
  %370 = vmatprep.subr.bf16.mxu0 0
  %371 = vmatpush1.bf16.msra.mxu0 %v217
  %372 = vmatprep.subr.bf16.mxu0 0
  %373 = vmatpush1.bf16.msra.mxu0 %v220
  %374 = vmatprep.subr.bf16.mxu0 0
  %375 = vmatpush1.bf16.msra.mxu0 0
  %376 = vmatprep.subr.bf16.mxu0 0
  %377 = vmatpush1.bf16.msra.mxu0 0
  %378 = vmatprep.subr.bf16.mxu0 0
  %379 = vmatpush1.bf16.msra.mxu0 0
  %380 = vmatprep.subr.bf16.mxu0 0
  %381 = vmatpush1.bf16.msra.mxu0 0
  %382 = vmatprep.subr.bf16.mxu0 0
  %383 = vmatpush1.bf16.msra.mxu0 0
  %384 = vmatprep.subr.bf16.mxu0 0
  %385 = vmatpush1.bf16.msra.mxu0 0
  %386 = vmatprep.subr.bf16.mxu0 0
  %387 = vmatpush1.bf16.msra.mxu0 0
  %388 = vmatprep.subr.bf16.mxu0 0
  %389 = vmatpush1.bf16.msra.mxu0 0
  %390 = vmatprep.mubr.bf16.mxu0 0
  %391 = vmatmul.mubr.bf16.gmra.mrb[0].mxu0 %v101
  %v392 = vpop.f32.mrb[0].mxu0
  %v393 = vadd.f32 0.0, %v392
  %v394 = vpop.f32.mrb[0].mxu0
  %v395 = vpop.f32.mrb[0].mxu0
  %v396 = vadd.f32 0.0, %v395
  %v397 = vpop.f32.mrb[0].mxu0
  %398 = vmatprep.mubr.bf16.mxu0 0
  %399 = vmatmul.mubr.bf16.gmra.mrb[0].mxu0 %v102
  %v400 = vpop.f32.mrb[0].mxu0
  %v401 = vadd.f32 0.0, %v400
  %v402 = vpop.f32.mrb[0].mxu0
  %v403 = vpop.f32.mrb[0].mxu0
  %v404 = vadd.f32 0.0, %v403
  %v405 = vpop.f32.mrb[0].mxu0
  %406 = vmatprep.mubr.bf16.mxu0 0
  %407 = vmatmul.mubr.bf16.gmra.mrb[0].mxu0 %v103
  %v408 = vpop.f32.mrb[0].mxu0
  %v409 = vadd.f32 0.0, %v408
  %v410 = vpop.f32.mrb[0].mxu0
  %v411 = vpop.f32.mrb[0].mxu0
  %v412 = vadd.f32 0.0, %v411
  %v413 = vpop.f32.mrb[0].mxu0
  %414 = vmatprep.mubr.bf16.mxu0 0
  %415 = vmatmul.mubr.bf16.gmra.mrb[0].mxu0 %v104
  %v416 = vpop.f32.mrb[0].mxu0
  %v417 = vadd.f32 0.0, %v416
  %v418 = vpop.f32.mrb[0].mxu0
  %v419 = vpop.f32.mrb[0].mxu0
  %v420 = vadd.f32 0.0, %v419
  %v421 = vpop.f32.mrb[0].mxu0
  %422 = vmatprep.mubr.bf16.mxu0 0
  %423 = vmatmul.mubr.bf16.gmra.mrb[0].mxu0 %v105
  %v424 = vpop.f32.mrb[0].mxu0
  %v425 = vadd.f32 0.0, %v424
  %v426 = vpop.f32.mrb[0].mxu0
  %v427 = vpop.f32.mrb[0].mxu0
  %v428 = vadd.f32 0.0, %v427
  %v429 = vpop.f32.mrb[0].mxu0
  %430 = vmatprep.mubr.bf16.mxu0 0
  %431 = vmatmul.mubr.bf16.gmra.mrb[0].mxu0 %v106
  %v432 = vpop.f32.mrb[0].mxu0
  %v433 = vadd.f32 0.0, %v432
  %v434 = vpop.f32.mrb[0].mxu0
  %v435 = vpop.f32.mrb[0].mxu0
  %v436 = vadd.f32 0.0, %v435
  %v437 = vpop.f32.mrb[0].mxu0
  %438 = vmatprep.mubr.bf16.mxu0 0
  %439 = vmatmul.mubr.bf16.gmra.mrb[0].mxu0 %v107
  %v440 = vpop.f32.mrb[0].mxu0
  %v441 = vadd.f32 0.0, %v440
  %v442 = vpop.f32.mrb[0].mxu0
  %v443 = vpop.f32.mrb[0].mxu0
  %v444 = vadd.f32 0.0, %v443
  %v445 = vpop.f32.mrb[0].mxu0
  %446 = vmatprep.mubr.bf16.mxu0 0
  %447 = vmatmul.mubr.bf16.gmra.mrb[0].mxu0 %v108
  %v448 = vpop.f32.mrb[0].mxu0
  %v449 = vadd.f32 0.0, %v448
  %v450 = vpop.f32.mrb[0].mxu0
  %v451 = vpop.f32.mrb[0].mxu0
  %v452 = vadd.f32 0.0, %v451
  %v453 = vpop.f32.mrb[0].mxu0
  %454 = vdwg.mxu0
  %v455 = vld [vmem:[%s2] sm:$0x7]
  %v457 = vlaneseq
  %v458 = vshrl.u32 %v457, 7
  %v459 = vsub.s32 0, %v458
  %v460 = vrot.slane %v455, %v459
  %v461 = vlaneseq
  %v462 = vshrl.u32 %v461, 7
  %v463 = vsub.s32 1, %v462
  %v464 = vrot.slane %v455, %v463
  %v465 = vlaneseq
  %v466 = vshrl.u32 %v465, 7
  %v467 = vsub.s32 2, %v466
  %v468 = vrot.slane %v455, %v467
  %v472 = vadd.f32 %v280, %v460
  %v473 = vadd.f32 %v282, %v464
  %v474 = vadd.f32 %v393, %v468
  %v475 = vadd.f32 %v284, %v460
  %v476 = vadd.f32 %v286, %v464
  %v477 = vadd.f32 %v396, %v468
  %v478 = vadd.f32 %v290, %v460
  %v479 = vadd.f32 %v292, %v464
  %v480 = vadd.f32 %v401, %v468
  %v481 = vadd.f32 %v294, %v460
  %v482 = vadd.f32 %v296, %v464
  %v483 = vadd.f32 %v404, %v468
  %v484 = vadd.f32 %v300, %v460
  %v485 = vadd.f32 %v302, %v464
  %v486 = vadd.f32 %v409, %v468
  %v487 = vadd.f32 %v304, %v460
  %v488 = vadd.f32 %v306, %v464
  %v489 = vadd.f32 %v412, %v468
  %v490 = vadd.f32 %v310, %v460
  %v491 = vadd.f32 %v312, %v464
  %v492 = vadd.f32 %v417, %v468
  %v493 = vadd.f32 %v314, %v460
  %v494 = vadd.f32 %v316, %v464
  %v495 = vadd.f32 %v420, %v468
  %v496 = vadd.f32 %v320, %v460
  %v497 = vadd.f32 %v322, %v464
  %v498 = vadd.f32 %v425, %v468
  %v499 = vadd.f32 %v324, %v460
  %v500 = vadd.f32 %v326, %v464
  %v501 = vadd.f32 %v428, %v468
  %v502 = vadd.f32 %v330, %v460
  %v503 = vadd.f32 %v332, %v464
  %v504 = vadd.f32 %v433, %v468
  %v505 = vadd.f32 %v334, %v460
  %v506 = vadd.f32 %v336, %v464
  %v507 = vadd.f32 %v436, %v468
  %v508 = vadd.f32 %v340, %v460
  %v509 = vadd.f32 %v342, %v464
  %v510 = vadd.f32 %v441, %v468
  %v511 = vadd.f32 %v344, %v460
  %v512 = vadd.f32 %v346, %v464
  %v513 = vadd.f32 %v444, %v468
  %v514 = vadd.f32 %v350, %v460
  %v515 = vadd.f32 %v352, %v464
  %v516 = vadd.f32 %v449, %v468
  %v517 = vadd.f32 %v354, %v460
  %v518 = vadd.f32 %v356, %v464
  %v519 = vadd.f32 %v452, %v468
  %v520 = vlaneseq
  %v521 = vshrl.u32 %v520, 7
  %v522 = vadd.s32 %v521, 8
  %v523 = vlaneseq
  %v524 = vand.u32 %v523, 127
  %v525 = vadd.s32 %v524, 128
  %v526 = vadd.s32 %v524, 256
  %vm527 = vcmp.lt.s32.totalorder %v524, 128
  %vm528 = vcmp.lt.s32.totalorder %v525, 128
  %vm529 = vcmp.lt.s32.totalorder %v526, 128
  %vm530 = vcmp.lt.s32.totalorder %v524, 256
  %vm531 = vcmp.lt.s32.totalorder %v525, 256
  %vm532 = vcmp.lt.s32.totalorder %v526, 256
  %v533 = vsel %vm530, 13, 12
  %v534 = vsel %vm531, 13, 12
  %v535 = vsel %vm532, 13, 12
  %v536 = vsel %vm527, 14, %v533
  %v537 = vsel %vm528, 14, %v534
  %v538 = vsel %vm529, 14, %v535
  %vm539 = vcmp.lt.s32.totalorder %v521, %v536
  %vm540 = vcmp.lt.s32.totalorder %v521, %v537
  %vm541 = vcmp.lt.s32.totalorder %v521, %v538
  %vm542 = vcmp.lt.s32.totalorder %v522, %v536
  %vm543 = vcmp.lt.s32.totalorder %v522, %v537
  %vm544 = vcmp.lt.s32.totalorder %v522, %v538
  %v545 = vmax.f32 %v472, 0.0
  %v546 = vmax.f32 %v473, 0.0
  %v547 = vmax.f32 %v474, 0.0
  %v548 = vmax.f32 %v475, 0.0
  %v549 = vmax.f32 %v476, 0.0
  %v550 = vmax.f32 %v477, 0.0
  %v551 = vmax.f32 %v478, 0.0
  %v552 = vmax.f32 %v479, 0.0
  %v553 = vmax.f32 %v480, 0.0
  %v554 = vmax.f32 %v481, 0.0
  %v555 = vmax.f32 %v482, 0.0
  %v556 = vmax.f32 %v483, 0.0
  %v557 = vmax.f32 %v484, 0.0
  %v558 = vmax.f32 %v485, 0.0
  %v559 = vmax.f32 %v486, 0.0
  %v560 = vmax.f32 %v487, 0.0
  %v561 = vmax.f32 %v488, 0.0
  %v562 = vmax.f32 %v489, 0.0
  %v563 = vmax.f32 %v490, 0.0
  %v564 = vmax.f32 %v491, 0.0
  %v565 = vmax.f32 %v492, 0.0
  %v566 = vmax.f32 %v493, 0.0
  %v567 = vmax.f32 %v494, 0.0
  %v568 = vmax.f32 %v495, 0.0
  %v569 = vmax.f32 %v496, 0.0
  %v570 = vmax.f32 %v497, 0.0
  %v571 = vmax.f32 %v498, 0.0
  %v572 = vmax.f32 %v499, 0.0
  %v573 = vmax.f32 %v500, 0.0
  %v574 = vmax.f32 %v501, 0.0
  %v575 = vmax.f32 %v502, 0.0
  %v576 = vmax.f32 %v503, 0.0
  %v577 = vmax.f32 %v504, 0.0
  %v578 = vmax.f32 %v505, 0.0
  %v579 = vmax.f32 %v506, 0.0
  %v580 = vmax.f32 %v507, 0.0
  %v581 = vmax.f32 %v508, 0.0
  %v582 = vmax.f32 %v509, 0.0
  %v583 = vmax.f32 %v510, 0.0
  %v584 = vmax.f32 %v511, 0.0
  %v585 = vmax.f32 %v512, 0.0
  %v586 = vmax.f32 %v513, 0.0
  %v587 = vmax.f32 %v514, 0.0
  %v588 = vmax.f32 %v515, 0.0
  %v589 = vmax.f32 %v516, 0.0
  %v590 = vmax.f32 %v517, 0.0
  %v591 = vmax.f32 %v518, 0.0
  %v592 = vmax.f32 %v519, 0.0
  %v593 = vsel %vm539, 1, 0
  %v594 = vsel %vm540, 1, 0
  %v595 = vsel %vm541, 1, 0
  %v596 = vsel %vm542, 1, 0
  %v597 = vsel %vm543, 1, 0
  %v598 = vsel %vm544, 1, 0
  %vm599 = vcmp.eq.s32.totalorder %v593, 1
  %vm600 = vcmp.eq.s32.totalorder %v594, 1
  %vm601 = vcmp.eq.s32.totalorder %v595, 1
  %vm602 = vcmp.eq.s32.totalorder %v596, 1
  %vm603 = vcmp.eq.s32.totalorder %v597, 1
  %vm604 = vcmp.eq.s32.totalorder %v598, 1
  %v605 = vsel %vm599, %v545, 0.0
  %v606 = vsel %vm600, %v546, 0.0
  %v607 = vsel %vm601, %v547, 0.0
  %v608 = vsel %vm602, %v548, 0.0
  %v609 = vsel %vm603, %v549, 0.0
  %v610 = vsel %vm604, %v550, 0.0
  %v611 = vsel %vm599, %v551, 0.0
  %v612 = vsel %vm600, %v552, 0.0
  %v613 = vsel %vm601, %v553, 0.0
  %v614 = vsel %vm602, %v554, 0.0
  %v615 = vsel %vm603, %v555, 0.0
  %v616 = vsel %vm604, %v556, 0.0
  %v617 = vsel %vm599, %v557, 0.0
  %v618 = vsel %vm600, %v558, 0.0
  %v619 = vsel %vm601, %v559, 0.0
  %v620 = vsel %vm602, %v560, 0.0
  %v621 = vsel %vm603, %v561, 0.0
  %v622 = vsel %vm604, %v562, 0.0
  %v623 = vsel %vm599, %v563, 0.0
  %v624 = vsel %vm600, %v564, 0.0
  %v625 = vsel %vm601, %v565, 0.0
  %v626 = vsel %vm602, %v566, 0.0
  %v627 = vsel %vm603, %v567, 0.0
  %v628 = vsel %vm604, %v568, 0.0
  %v629 = vsel %vm599, %v569, 0.0
  %v630 = vsel %vm600, %v570, 0.0
  %v631 = vsel %vm601, %v571, 0.0
  %v632 = vsel %vm602, %v572, 0.0
  %v633 = vsel %vm603, %v573, 0.0
  %v634 = vsel %vm604, %v574, 0.0
  %v635 = vsel %vm599, %v575, 0.0
  %v636 = vsel %vm600, %v576, 0.0
  %v637 = vsel %vm601, %v577, 0.0
  %v638 = vsel %vm602, %v578, 0.0
  %v639 = vsel %vm603, %v579, 0.0
  %v640 = vsel %vm604, %v580, 0.0
  %v641 = vsel %vm599, %v581, 0.0
  %v642 = vsel %vm600, %v582, 0.0
  %v643 = vsel %vm601, %v583, 0.0
  %v644 = vsel %vm602, %v584, 0.0
  %v645 = vsel %vm603, %v585, 0.0
  %v646 = vsel %vm604, %v586, 0.0
  %v647 = vsel %vm599, %v587, 0.0
  %v648 = vsel %vm600, %v588, 0.0
  %v649 = vsel %vm601, %v589, 0.0
  %v650 = vsel %vm602, %v590, 0.0
  %v651 = vsel %vm603, %v591, 0.0
  %v652 = vsel %vm604, %v592, 0.0
  %v653 = vmax.f32 %v605, %v608
  %v654 = vrot.slane %v653, 4
  %v655 = vmax.f32 %v653, %v654
  %v656 = vrot.slane %v655, 2
  %v657 = vmax.f32 %v655, %v656
  %v658 = vrot.slane %v657, 1
  %v659 = vmax.f32 %v657, %v658
  %v660 = vmax.f32 %v606, %v609
  %v661 = vrot.slane %v660, 4
  %v662 = vmax.f32 %v660, %v661
  %v663 = vrot.slane %v662, 2
  %v664 = vmax.f32 %v662, %v663
  %v665 = vrot.slane %v664, 1
  %v666 = vmax.f32 %v664, %v665
  %v667 = vmax.f32 %v607, %v610
  %v668 = vrot.slane %v667, 4
  %v669 = vmax.f32 %v667, %v668
  %v670 = vrot.slane %v669, 2
  %v671 = vmax.f32 %v669, %v670
  %v672 = vrot.slane %v671, 1
  %v673 = vmax.f32 %v671, %v672
  %v674 = vmax.f32 %v611, %v614
  %v675 = vrot.slane %v674, 4
  %v676 = vmax.f32 %v674, %v675
  %v677 = vrot.slane %v676, 2
  %v678 = vmax.f32 %v676, %v677
  %v679 = vrot.slane %v678, 1
  %v680 = vmax.f32 %v678, %v679
  %v681 = vmax.f32 %v612, %v615
  %v682 = vrot.slane %v681, 4
  %v683 = vmax.f32 %v681, %v682
  %v684 = vrot.slane %v683, 2
  %v685 = vmax.f32 %v683, %v684
  %v686 = vrot.slane %v685, 1
  %v687 = vmax.f32 %v685, %v686
  %v688 = vmax.f32 %v613, %v616
  %v689 = vrot.slane %v688, 4
  %v690 = vmax.f32 %v688, %v689
  %v691 = vrot.slane %v690, 2
  %v692 = vmax.f32 %v690, %v691
  %v693 = vrot.slane %v692, 1
  %v694 = vmax.f32 %v692, %v693
  %v695 = vmax.f32 %v617, %v620
  %v696 = vrot.slane %v695, 4
  %v697 = vmax.f32 %v695, %v696
  %v698 = vrot.slane %v697, 2
  %v699 = vmax.f32 %v697, %v698
  %v700 = vrot.slane %v699, 1
  %v701 = vmax.f32 %v699, %v700
  %v702 = vmax.f32 %v618, %v621
  %v703 = vrot.slane %v702, 4
  %v704 = vmax.f32 %v702, %v703
  %v705 = vrot.slane %v704, 2
  %v706 = vmax.f32 %v704, %v705
  %v707 = vrot.slane %v706, 1
  %v708 = vmax.f32 %v706, %v707
  %v709 = vmax.f32 %v619, %v622
  %v710 = vrot.slane %v709, 4
  %v711 = vmax.f32 %v709, %v710
  %v712 = vrot.slane %v711, 2
  %v713 = vmax.f32 %v711, %v712
  %v714 = vrot.slane %v713, 1
  %v715 = vmax.f32 %v713, %v714
  %v716 = vmax.f32 %v623, %v626
  %v717 = vrot.slane %v716, 4
  %v718 = vmax.f32 %v716, %v717
  %v719 = vrot.slane %v718, 2
  %v720 = vmax.f32 %v718, %v719
  %v721 = vrot.slane %v720, 1
  %v722 = vmax.f32 %v720, %v721
  %v723 = vmax.f32 %v624, %v627
  %v724 = vrot.slane %v723, 4
  %v725 = vmax.f32 %v723, %v724
  %v726 = vrot.slane %v725, 2
  %v727 = vmax.f32 %v725, %v726
  %v728 = vrot.slane %v727, 1
  %v729 = vmax.f32 %v727, %v728
  %v730 = vmax.f32 %v625, %v628
  %v731 = vrot.slane %v730, 4
  %v732 = vmax.f32 %v730, %v731
  %v733 = vrot.slane %v732, 2
  %v734 = vmax.f32 %v732, %v733
  %v735 = vrot.slane %v734, 1
  %v736 = vmax.f32 %v734, %v735
  %v737 = vmax.f32 %v629, %v632
  %v738 = vrot.slane %v737, 4
  %v739 = vmax.f32 %v737, %v738
  %v740 = vrot.slane %v739, 2
  %v741 = vmax.f32 %v739, %v740
  %v742 = vrot.slane %v741, 1
  %v743 = vmax.f32 %v741, %v742
  %v744 = vmax.f32 %v630, %v633
  %v745 = vrot.slane %v744, 4
  %v746 = vmax.f32 %v744, %v745
  %v747 = vrot.slane %v746, 2
  %v748 = vmax.f32 %v746, %v747
  %v749 = vrot.slane %v748, 1
  %v750 = vmax.f32 %v748, %v749
  %v751 = vmax.f32 %v631, %v634
  %v752 = vrot.slane %v751, 4
  %v753 = vmax.f32 %v751, %v752
  %v754 = vrot.slane %v753, 2
  %v755 = vmax.f32 %v753, %v754
  %v756 = vrot.slane %v755, 1
  %v757 = vmax.f32 %v755, %v756
  %v758 = vmax.f32 %v635, %v638
  %v759 = vrot.slane %v758, 4
  %v760 = vmax.f32 %v758, %v759
  %v761 = vrot.slane %v760, 2
  %v762 = vmax.f32 %v760, %v761
  %v763 = vrot.slane %v762, 1
  %v764 = vmax.f32 %v762, %v763
  %v765 = vmax.f32 %v636, %v639
  %v766 = vrot.slane %v765, 4
  %v767 = vmax.f32 %v765, %v766
  %v768 = vrot.slane %v767, 2
  %v769 = vmax.f32 %v767, %v768
  %v770 = vrot.slane %v769, 1
  %v771 = vmax.f32 %v769, %v770
  %v772 = vmax.f32 %v637, %v640
  %v773 = vrot.slane %v772, 4
  %v774 = vmax.f32 %v772, %v773
  %v775 = vrot.slane %v774, 2
  %v776 = vmax.f32 %v774, %v775
  %v777 = vrot.slane %v776, 1
  %v778 = vmax.f32 %v776, %v777
  %v779 = vmax.f32 %v641, %v644
  %v780 = vrot.slane %v779, 4
  %v781 = vmax.f32 %v779, %v780
  %v782 = vrot.slane %v781, 2
  %v783 = vmax.f32 %v781, %v782
  %v784 = vrot.slane %v783, 1
  %v785 = vmax.f32 %v783, %v784
  %v786 = vmax.f32 %v642, %v645
  %v787 = vrot.slane %v786, 4
  %v788 = vmax.f32 %v786, %v787
  %v789 = vrot.slane %v788, 2
  %v790 = vmax.f32 %v788, %v789
  %v791 = vrot.slane %v790, 1
  %v792 = vmax.f32 %v790, %v791
  %v793 = vmax.f32 %v643, %v646
  %v794 = vrot.slane %v793, 4
  %v795 = vmax.f32 %v793, %v794
  %v796 = vrot.slane %v795, 2
  %v797 = vmax.f32 %v795, %v796
  %v798 = vrot.slane %v797, 1
  %v799 = vmax.f32 %v797, %v798
  %v800 = vmax.f32 %v647, %v650
  %v801 = vrot.slane %v800, 4
  %v802 = vmax.f32 %v800, %v801
  %v803 = vrot.slane %v802, 2
  %v804 = vmax.f32 %v802, %v803
  %v805 = vrot.slane %v804, 1
  %v806 = vmax.f32 %v804, %v805
  %v807 = vmax.f32 %v648, %v651
  %v808 = vrot.slane %v807, 4
  %v809 = vmax.f32 %v807, %v808
  %v810 = vrot.slane %v809, 2
  %v811 = vmax.f32 %v809, %v810
  %v812 = vrot.slane %v811, 1
  %v813 = vmax.f32 %v811, %v812
  %v814 = vmax.f32 %v649, %v652
  %v815 = vrot.slane %v814, 4
  %v816 = vmax.f32 %v814, %v815
  %v817 = vrot.slane %v816, 2
  %v818 = vmax.f32 %v816, %v817
  %v819 = vrot.slane %v818, 1
  %v820 = vmax.f32 %v818, %v819
  %v821 = vpack.c.bf16 %v659, %v659
  %v822 = vpack.c.bf16 %v666, %v666
  %v823 = vpack.c.bf16 %v673, %v673
  %v824 = vpack.c.bf16 %v680, %v680
  %v825 = vpack.c.bf16 %v687, %v687
  %v826 = vpack.c.bf16 %v694, %v694
  %v827 = vpack.c.bf16 %v701, %v701
  %v828 = vpack.c.bf16 %v708, %v708
  %v829 = vpack.c.bf16 %v715, %v715
  %v830 = vpack.c.bf16 %v722, %v722
  %v831 = vpack.c.bf16 %v729, %v729
  %v832 = vpack.c.bf16 %v736, %v736
  %v833 = vpack.c.bf16 %v743, %v743
  %v834 = vpack.c.bf16 %v750, %v750
  %v835 = vpack.c.bf16 %v757, %v757
  %v836 = vpack.c.bf16 %v764, %v764
  %v837 = vpack.c.bf16 %v771, %v771
  %v838 = vpack.c.bf16 %v778, %v778
  %v839 = vpack.c.bf16 %v785, %v785
  %v840 = vpack.c.bf16 %v792, %v792
  %v841 = vpack.c.bf16 %v799, %v799
  %v842 = vpack.c.bf16 %v806, %v806
  %v843 = vpack.c.bf16 %v813, %v813
  %v844 = vpack.c.bf16 %v820, %v820
  %v845 = vld [vmem:[%s3] sm:$0xf]
  %v846 = vld [vmem:[%s3 + $0x4] sm:$0xf]
  %v847 = vld [vmem:[%s3 + $0x8] sm:$0xf]
  %v848 = vld [vmem:[%s3 + $0xc] sm:$0xf]
  %v849 = vld [vmem:[%s3 + $0x10] sm:$0xf]
  %v850 = vld [vmem:[%s3 + $0x14] sm:$0xf]
  %v851 = vld [vmem:[%s3 + $0x18] sm:$0xf]
  %v852 = vld [vmem:[%s3 + $0x1c] sm:$0xf]
  %v853 = vld [vmem:[%s3 + $0x20] sm:$0xf]
  %v854 = vld [vmem:[%s3 + $0x24] sm:$0xf]
  %v855 = vld [vmem:[%s3 + $0x28] sm:$0xf]
  %v856 = vld [vmem:[%s3 + $0x2c] sm:$0xf]
  %v857 = vld [vmem:[%s3 + $0x30] sm:$0xf]
  %v858 = vld [vmem:[%s3 + $0x34] sm:$0xf]
  %v859 = vld [vmem:[%s3 + $0x38] sm:$0xf]
  %v860 = vld [vmem:[%s3 + $0x3c] sm:$0xf]
  %v861 = vld [vmem:[%s3 + $0x40] sm:$0xf]
  %v862 = vld [vmem:[%s3 + $0x44] sm:$0xf]
  %v863 = vld [vmem:[%s3 + $0x48] sm:$0xf]
  %v864 = vld [vmem:[%s3 + $0x4c] sm:$0xf]
  %v865 = vld [vmem:[%s3 + $0x50] sm:$0xf]
  %v866 = vld [vmem:[%s3 + $0x54] sm:$0xf]
  %v867 = vld [vmem:[%s3 + $0x58] sm:$0xf]
  %v868 = vld [vmem:[%s3 + $0x5c] sm:$0xf]
  %v869 = vld [vmem:[%s3 + $0x60] sm:$0xf]
  %v870 = vld [vmem:[%s3 + $0x64] sm:$0xf]
  %v871 = vld [vmem:[%s3 + $0x68] sm:$0xf]
  %v872 = vld [vmem:[%s3 + $0x6c] sm:$0xf]
  %v873 = vld [vmem:[%s3 + $0x70] sm:$0xf]
  %v874 = vld [vmem:[%s3 + $0x74] sm:$0xf]
  %v875 = vld [vmem:[%s3 + $0x78] sm:$0xf]
  %v876 = vld [vmem:[%s3 + $0x7c] sm:$0xf]
  %v877 = vld [vmem:[%s3 + $0x80] sm:$0xf]
  %v878 = vld [vmem:[%s3 + $0x84] sm:$0xf]
  %v879 = vld [vmem:[%s3 + $0x88] sm:$0xf]
  %v880 = vld [vmem:[%s3 + $0x8c] sm:$0xf]
  %v881 = vld [vmem:[%s3 + $0x90] sm:$0xf]
  %v882 = vld [vmem:[%s3 + $0x94] sm:$0xf]
  %v883 = vld [vmem:[%s3 + $0x98] sm:$0xf]
  %v884 = vld [vmem:[%s3 + $0x9c] sm:$0xf]
  %v885 = vld [vmem:[%s3 + $0xa0] sm:$0xf]
  %v886 = vld [vmem:[%s3 + $0xa4] sm:$0xf]
  %v887 = vld [vmem:[%s3 + $0xa8] sm:$0xf]
  %v888 = vld [vmem:[%s3 + $0xac] sm:$0xf]
  %v889 = vld [vmem:[%s3 + $0xb0] sm:$0xf]
  %v890 = vld [vmem:[%s3 + $0xb4] sm:$0xf]
  %v891 = vld [vmem:[%s3 + $0xb8] sm:$0xf]
  %v892 = vld [vmem:[%s3 + $0xbc] sm:$0xf]
  %v893 = vld [vmem:[%s4] sm:$0x1]
  %v895 = vlaneseq
  %v896 = vshrl.u32 %v895, 7
  %v897 = vsub.s32 0, %v896
  %v898 = vrot.slane %v893, %v897
  %v924 = vunpack.c.l.b16 %v821
  %v925 = vunpack.c.l.b16 %v822
  %v926 = vunpack.c.l.b16 %v823
  %v927 = vunpack.c.l.b16 %v824
  %v928 = vunpack.c.l.b16 %v825
  %v929 = vunpack.c.l.b16 %v826
  %v930 = vunpack.c.l.b16 %v827
  %v931 = vunpack.c.l.b16 %v828
  %v932 = vunpack.c.l.b16 %v829
  %v933 = vunpack.c.l.b16 %v830
  %v934 = vunpack.c.l.b16 %v831
  %v935 = vunpack.c.l.b16 %v832
  %v936 = vunpack.c.l.b16 %v833
  %v937 = vunpack.c.l.b16 %v834
  %v938 = vunpack.c.l.b16 %v835
  %v939 = vunpack.c.l.b16 %v836
  %v940 = vunpack.c.l.b16 %v837
  %v941 = vunpack.c.l.b16 %v838
  %v942 = vunpack.c.l.b16 %v839
  %v943 = vunpack.c.l.b16 %v840
  %v944 = vunpack.c.l.b16 %v841
  %v945 = vunpack.c.l.b16 %v842
  %v946 = vunpack.c.l.b16 %v843
  %v947 = vunpack.c.l.b16 %v844
  %vm948 = vcmask 1041409
  %v949 = vsel %vm948, %v927, %v924
  %vm950 = vcmask 1042434
  %v951 = vsel %vm950, %v930, %v949
  %vm952 = vcmask 1043459
  %v953 = vsel %vm952, %v933, %v951
  %vm954 = vcmask 1044484
  %v955 = vsel %vm954, %v936, %v953
  %vm956 = vcmask 1045509
  %v957 = vsel %vm956, %v939, %v955
  %vm958 = vcmask 1046534
  %v959 = vsel %vm958, %v942, %v957
  %vm960 = vcmask 1047559
  %v961 = vsel %vm960, %v945, %v959
  %v962 = vsel %vm948, %v928, %v925
  %v963 = vsel %vm950, %v931, %v962
  %v964 = vsel %vm952, %v934, %v963
  %v965 = vsel %vm954, %v937, %v964
  %v966 = vsel %vm956, %v940, %v965
  %v967 = vsel %vm958, %v943, %v966
  %v968 = vsel %vm960, %v946, %v967
  %v969 = vsel %vm948, %v929, %v926
  %v970 = vsel %vm950, %v932, %v969
  %v971 = vsel %vm952, %v935, %v970
  %v972 = vsel %vm954, %v938, %v971
  %v973 = vsel %vm956, %v941, %v972
  %v974 = vsel %vm958, %v944, %v973
  %v975 = vsel %vm960, %v947, %v974
  %v976 = vpack.c.b16 %v961, %v961
  %v977 = vpack.c.b16 %v968, %v968
  %v978 = vpack.c.b16 %v975, %v975
  %v1030 = vunpack.c.l.b16 %v845
  %v1031 = vunpack.c.l.b16 %v846
  %v1032 = vunpack.c.l.b16 %v847
  %v1033 = vunpack.c.l.b16 %v848
  %v1034 = vunpack.c.l.b16 %v849
  %v1035 = vunpack.c.l.b16 %v850
  %v1036 = vunpack.c.l.b16 %v851
  %v1037 = vunpack.c.l.b16 %v852
  %v1038 = vunpack.c.l.b16 %v853
  %v1039 = vunpack.c.l.b16 %v854
  %v1040 = vunpack.c.l.b16 %v855
  %v1041 = vunpack.c.l.b16 %v856
  %v1042 = vunpack.c.l.b16 %v857
  %v1043 = vunpack.c.l.b16 %v858
  %v1044 = vunpack.c.l.b16 %v859
  %v1045 = vunpack.c.l.b16 %v860
  %v1046 = vunpack.c.l.b16 %v861
  %v1047 = vunpack.c.l.b16 %v862
  %v1048 = vunpack.c.l.b16 %v863
  %v1049 = vunpack.c.l.b16 %v864
  %v1050 = vunpack.c.l.b16 %v865
  %v1051 = vunpack.c.l.b16 %v866
  %v1052 = vunpack.c.l.b16 %v867
  %v1053 = vunpack.c.l.b16 %v868
  %v1054 = vunpack.c.l.b16 %v869
  %v1055 = vunpack.c.l.b16 %v870
  %v1056 = vunpack.c.l.b16 %v871
  %v1057 = vunpack.c.l.b16 %v872
  %v1058 = vunpack.c.l.b16 %v873
  %v1059 = vunpack.c.l.b16 %v874
  %v1060 = vunpack.c.l.b16 %v875
  %v1061 = vunpack.c.l.b16 %v876
  %v1062 = vunpack.c.l.b16 %v877
  %v1063 = vunpack.c.l.b16 %v878
  %v1064 = vunpack.c.l.b16 %v879
  %v1065 = vunpack.c.l.b16 %v880
  %v1066 = vunpack.c.l.b16 %v881
  %v1067 = vunpack.c.l.b16 %v882
  %v1068 = vunpack.c.l.b16 %v883
  %v1069 = vunpack.c.l.b16 %v884
  %v1070 = vunpack.c.l.b16 %v885
  %v1071 = vunpack.c.l.b16 %v886
  %v1072 = vunpack.c.l.b16 %v887
  %v1073 = vunpack.c.l.b16 %v888
  %v1074 = vunpack.c.l.b16 %v889
  %v1075 = vunpack.c.l.b16 %v890
  %v1076 = vunpack.c.l.b16 %v891
  %v1077 = vunpack.c.l.b16 %v892
  %v1078 = vpack.c.b16 %v1031, %v1030
  %v1079 = vpack.c.b16 %v1033, %v1032
  %v1080 = vpack.c.b16 %v1035, %v1034
  %v1081 = vpack.c.b16 %v1037, %v1036
  %v1082 = vpack.c.b16 %v1039, %v1038
  %v1083 = vpack.c.b16 %v1041, %v1040
  %v1084 = vpack.c.b16 %v1043, %v1042
  %v1085 = vpack.c.b16 %v1045, %v1044
  %v1086 = vpack.c.b16 %v1047, %v1046
  %v1087 = vpack.c.b16 %v1049, %v1048
  %v1088 = vpack.c.b16 %v1051, %v1050
  %v1089 = vpack.c.b16 %v1053, %v1052
  %v1090 = vpack.c.b16 %v1055, %v1054
  %v1091 = vpack.c.b16 %v1057, %v1056
  %v1092 = vpack.c.b16 %v1059, %v1058
  %v1093 = vpack.c.b16 %v1061, %v1060
  %v1094 = vpack.c.b16 %v1063, %v1062
  %v1095 = vpack.c.b16 %v1065, %v1064
  %v1096 = vpack.c.b16 %v1067, %v1066
  %v1097 = vpack.c.b16 %v1069, %v1068
  %v1098 = vpack.c.b16 %v1071, %v1070
  %v1099 = vpack.c.b16 %v1073, %v1072
  %v1100 = vpack.c.b16 %v1075, %v1074
  %v1101 = vpack.c.b16 %v1077, %v1076
  %1126 = vmatprep.subr.bf16.mxu0 0
  %1127 = vmatpush1.bf16.msra.mxu0 %v1078
  %1128 = vmatprep.subr.bf16.mxu0 0
  %1129 = vmatpush1.bf16.msra.mxu0 %v1079
  %1130 = vmatprep.subr.bf16.mxu0 0
  %1131 = vmatpush1.bf16.msra.mxu0 %v1080
  %1132 = vmatprep.subr.bf16.mxu0 0
  %1133 = vmatpush1.bf16.msra.mxu0 %v1081
  %1134 = vmatprep.subr.bf16.mxu0 0
  %1135 = vmatpush1.bf16.msra.mxu0 %v1082
  %1136 = vmatprep.subr.bf16.mxu0 0
  %1137 = vmatpush1.bf16.msra.mxu0 %v1083
  %1138 = vmatprep.subr.bf16.mxu0 0
  %1139 = vmatpush1.bf16.msra.mxu0 %v1084
  %1140 = vmatprep.subr.bf16.mxu0 0
  %1141 = vmatpush1.bf16.msra.mxu0 %v1085
  %1142 = vmatprep.subr.bf16.mxu0 0
  %1143 = vmatpush1.bf16.msra.mxu0 %v1086
  %1144 = vmatprep.subr.bf16.mxu0 0
  %1145 = vmatpush1.bf16.msra.mxu0 %v1087
  %1146 = vmatprep.subr.bf16.mxu0 0
  %1147 = vmatpush1.bf16.msra.mxu0 %v1088
  %1148 = vmatprep.subr.bf16.mxu0 0
  %1149 = vmatpush1.bf16.msra.mxu0 %v1089
  %1150 = vmatprep.subr.bf16.mxu0 0
  %1151 = vmatpush1.bf16.msra.mxu0 %v1090
  %1152 = vmatprep.subr.bf16.mxu0 0
  %1153 = vmatpush1.bf16.msra.mxu0 %v1091
  %1154 = vmatprep.subr.bf16.mxu0 0
  %1155 = vmatpush1.bf16.msra.mxu0 %v1092
  %1156 = vmatprep.subr.bf16.mxu0 0
  %1157 = vmatpush1.bf16.msra.mxu0 %v1093
  %1158 = vmatprep.mubr.bf16.mxu0 %v977
  %1159 = vmatmul.mubr.bf16.gmra.mrb[0].mxu0 %v976
  %v1160 = vpop.f32.mrb[0].mxu0
  %v1161 = vadd.f32 %v898, %v1160
  %v1162 = vpop.f32.mrb[0].mxu0
  %v1163 = vpop.f32.mrb[0].mxu0
  %v1164 = vpop.f32.mrb[0].mxu0
  %1165 = vdwg.mxu0
  %1166 = vmatprep.subr.bf16.mxu0 0
  %1167 = vmatpush1.bf16.msra.mxu0 %v1094
  %1168 = vmatprep.subr.bf16.mxu0 0
  %1169 = vmatpush1.bf16.msra.mxu0 %v1095
  %1170 = vmatprep.subr.bf16.mxu0 0
  %1171 = vmatpush1.bf16.msra.mxu0 %v1096
  %1172 = vmatprep.subr.bf16.mxu0 0
  %1173 = vmatpush1.bf16.msra.mxu0 %v1097
  %1174 = vmatprep.subr.bf16.mxu0 0
  %1175 = vmatpush1.bf16.msra.mxu0 %v1098
  %1176 = vmatprep.subr.bf16.mxu0 0
  %1177 = vmatpush1.bf16.msra.mxu0 %v1099
  %1178 = vmatprep.subr.bf16.mxu0 0
  %1179 = vmatpush1.bf16.msra.mxu0 %v1100
  %1180 = vmatprep.subr.bf16.mxu0 0
  %1181 = vmatpush1.bf16.msra.mxu0 %v1101
  %1182 = vmatprep.subr.bf16.mxu0 0
  %1183 = vmatpush1.bf16.msra.mxu0 0
  %1184 = vmatprep.subr.bf16.mxu0 0
  %1185 = vmatpush1.bf16.msra.mxu0 0
  %1186 = vmatprep.subr.bf16.mxu0 0
  %1187 = vmatpush1.bf16.msra.mxu0 0
  %1188 = vmatprep.subr.bf16.mxu0 0
  %1189 = vmatpush1.bf16.msra.mxu0 0
  %1190 = vmatprep.subr.bf16.mxu0 0
  %1191 = vmatpush1.bf16.msra.mxu0 0
  %1192 = vmatprep.subr.bf16.mxu0 0
  %1193 = vmatpush1.bf16.msra.mxu0 0
  %1194 = vmatprep.subr.bf16.mxu0 0
  %1195 = vmatpush1.bf16.msra.mxu0 0
  %1196 = vmatprep.subr.bf16.mxu0 0
  %1197 = vmatpush1.bf16.msra.mxu0 0
  %1198 = vmatprep.mubr.bf16.mxu0 0
  %1199 = vmatmul.mubr.bf16.gmra.mrb[0].mxu0 %v978
  %v1200 = vpop.f32.mrb[0].mxu0
  %v1201 = vadd.f32 %v1161, %v1200
  %v1202 = vpop.f32.mrb[0].mxu0
  %v1203 = vpop.f32.mrb[0].mxu0
  %v1204 = vpop.f32.mrb[0].mxu0
  %1205 = vdwg.mxu0
  %1206 = vst [vmem:[%s5] sm:$0xff] %v1201
  // Predicated region
  $region22: #{cnn_forward.1} parent=0 // pred_check
    _
  $region23: #{cnn_forward.1} parent=0 // pred_check_branch
    %1208 = sbr.rel (0) target = $region25
  $region24: #{cnn_forward.1} parent=0 // pred_region
    _
  $region25: #{cnn_forward.1} parent=0 // pred_fallthru
    _
  // Predicated region
  $region26: #{cnn_forward.1} parent=0 // pred_check
    _
  $region27: #{cnn_forward.1} parent=0 // pred_check_branch
    %1210 = sbr.rel (0) target = $region29
  $region28: #{cnn_forward.1} parent=0 // pred_region
    _
  $region29: #{cnn_forward.1} parent=0 // pred_fallthru
    _

</llo_original>
